<compile_context>
chip_gen: v6e
topology: v6e:2x2x1
jax: 0.10.0
libtpu: 0.0.40
codegen_flags: <defaults>
</compile_context>

<pallas_src>
import functools

import jax
import jax.numpy as jnp
from jax.experimental import pallas as pl
from jax.experimental.pallas import tpu as pltpu


def _round_up(n, m):
    return ((n + m - 1) // m) * m


def _fused_mlp_softmax_kernel(x_ref, w_ref, b_ref, o_ref, *, n_labels):
    """One row-tile: logits = x @ W_eff + b_eff (over 128 padded lanes), then
    a numerically-stable row softmax; only the first `n_labels` lanes are stored.

    x_ref: (tile_m, F) bf16, w_ref: (F, L_pad) bf16, b_ref: (1, L_pad) f32,
    o_ref: (tile_m, n_labels) f32.  Padded label columns of W are zero and the
    corresponding bias entries are -1e30, so exp() of those lanes is exactly 0
    and the softmax over the real lanes is unaffected.
    """
    logits = jnp.dot(x_ref[...], w_ref[...],
                     preferred_element_type=jnp.float32) + b_ref[...]   # f32 epilogue
    m = jnp.max(logits, axis=-1, keepdims=True)
    e = jnp.exp(logits - m)
    denom = jnp.sum(e, axis=-1, keepdims=True)
    probs = e * pl.reciprocal(denom, approx=True)                       # EUP slot
    o_ref[...] = probs[:, :n_labels].astype(o_ref.dtype)                # narrow store


def mlp_forward(x, params, *, tile_m=1024):
    """x: (B, S, F) float32. params: per-layer weights (in, out) + biases (1, out)."""
    B, S, F = x.shape
    w1, b1 = params["w1"], params["b1"]
    w2, b2 = params["w2"], params["b2"]
    wo, bo = params["wo"], params["bo"]
    L = wo.shape[1]

    # ---- one-time fold of the purely-linear chain (f32, done by XLA) ----
    w_eff = w1 @ w2 @ w2 @ wo                                  # (F, L)
    b_eff = ((b1 @ w2 + b2) @ w2 + b2) @ wo + bo               # (1, L)

    # ---- lane-pad the label dim to 128 for the MXU / full-lane softmax ----
    L_pad = _round_up(max(L, 128), 128)
    w_bf16 = (jnp.zeros((F, L_pad), jnp.float32).at[:, :L].set(w_eff)
              ).astype(jnp.bfloat16)                           # bf16 RHS, resident
    b_pad = jnp.full((1, L_pad), -1e30, jnp.float32).at[:, :L].set(b_eff)

    # ---- bf16 activations: halves the dominant HBM read stream ----
    M = B * S
    x2d = x.reshape(M, F).astype(jnp.bfloat16)

    # ---- row tiling: multiple of 16 (bf16 sublane tile), capped at ~M/2 so a
    # 2-TC chip (v7x) gets >= 2 grid steps; non-divisible tail is masked by Pallas.
    half_m = _round_up(-(-M // 2), 16)
    tile_m = max(16, min(_round_up(tile_m, 16), half_m))
    grid_m = pl.cdiv(M, tile_m)

    # ---- explicit VMEM budget: only raise the scoped limit if needed (v7x has
    # 64 MiB physical / 32 MiB default scoped; v5e/v6e have 128 MiB).
    vmem_bytes = (2 * tile_m * F * 2      # double-buffered bf16 x tiles
                  + 2 * tile_m * L * 4    # double-buffered f32 output tiles
                  + F * L_pad * 2         # resident bf16 weights
                  + L_pad * 4)            # resident f32 bias
    vmem_limit = None
    if vmem_bytes > 24 * 2**20:
        vmem_limit = min(_round_up(2 * vmem_bytes, 2**20), 56 * 2**20)

    kernel = functools.partial(_fused_mlp_softmax_kernel, n_labels=L)
    resident = lambda i: (0, 0)   # weights/bias: same block every grid step

    out2d = pl.pallas_call(
        kernel,
        out_shape=jax.ShapeDtypeStruct((M, L), jnp.float32),
        grid_spec=pl.GridSpec(
            grid=(grid_m,),
            in_specs=[
                pl.BlockSpec((tile_m, F), lambda i: (i, 0)),   # x row tile (bf16)
                pl.BlockSpec((F, L_pad), resident),            # folded weights (bf16)
                pl.BlockSpec((1, L_pad), resident),            # folded bias (f32)
            ],
            out_specs=pl.BlockSpec((tile_m, L), lambda i: (i, 0)),   # narrow output
        ),
        compiler_params=pltpu.CompilerParams(
            dimension_semantics=("parallel",),
            vmem_limit_bytes=vmem_limit),
    )(x2d, w_bf16, b_pad)

    return out2d.reshape(B, S, L)


def init_params(key, n_features, n_labels, hidden=100):
    """Deterministic init mimicking nn.Linear: U(-1/sqrt(fan_in), 1/sqrt(fan_in)).
    Weights stored transposed (in, out) so the math is x @ W + b."""
    def linear(key, fan_in, fan_out):
        kw, kb = jax.random.split(key)
        bound = 1.0 / jnp.sqrt(fan_in)
        w = jax.random.uniform(kw, (fan_in, fan_out), jnp.float32, -bound, bound)
        b = jax.random.uniform(kb, (1, fan_out), jnp.float32, -bound, bound)
        return w, b

    k1, k2, k3 = jax.random.split(key, 3)
    w1, b1 = linear(k1, n_features, hidden)   # fc
    w2, b2 = linear(k2, hidden, hidden)       # fc2
    wo, bo = linear(k3, hidden, n_labels)     # output
    return {"w1": w1, "b1": b1, "w2": w2, "b2": b2, "wo": wo, "bo": bo}


def reference_forward(x, params):
    """Pure-JAX f32 reference of the unfused PyTorch forward (MLP1 path)."""
    h = x @ params["w1"] + params["b1"]
    h = h @ params["w2"] + params["b2"]
    h = h @ params["w2"] + params["b2"]
    logits = h @ params["wo"] + params["bo"]
    return jax.nn.softmax(logits, axis=-1)


if __name__ == "__main__":
    key = jax.random.PRNGKey(0)
    kx, kp = jax.random.split(key)

    # Small shapes consistent with the module: (batch, seq, n_features)
    B, S, F, L = 2, 8, 8, 4
    x = jax.random.normal(kx, (B, S, F), dtype=jnp.float32)
    params = init_params(kp, n_features=F, n_labels=L, hidden=100)

    out = mlp_forward(x, params)
    out = jax.block_until_ready(out)

    ref = reference_forward(x, params)
    assert out.shape == (B, S, L)
    # bf16 activations + bf16 folded weights + approx reciprocal: compare with a
    # tolerance that comfortably covers bf16 rounding (~1e-3 in probabilities).
    assert jnp.allclose(out, ref, atol=2e-2, rtol=2e-2), \
        f"max abs diff {jnp.max(jnp.abs(out - ref))}"
    # softmax rows sum to ~1 (approx reciprocal => ~2^-12 off exact 1)
    assert jnp.allclose(jnp.sum(out, axis=-1), jnp.ones((B, S)), atol=1e-2)

    print("KERNEL_OK")
</pallas_src>

<mosaic_0001>
module attributes {stable_mosaic.version = 11 : i64} {
  func.func @_fused_mlp_softmax_kernel(%arg0: i32, %arg1: memref<16x8xbf16, #tpu.memory_space<vmem>>, %arg2: memref<8x128xbf16, #tpu.memory_space<vmem>>, %arg3: memref<1x128xf32, #tpu.memory_space<vmem>>, %arg4: memref<16x4xf32, #tpu.memory_space<vmem>>) attributes {dimension_semantics = [#tpu.dimension_semantics<parallel>], iteration_bounds = array<i64: 1>, scalar_prefetch = 0 : i64, scratch_operands = 0 : i64, tpu.core_type = #tpu.core_type<tc>, window_params = [{transform_indices = @transform_0, window_bounds = array<i64: 16, 8>}, {pipeline_mode = #tpu.pipeline_mode<synchronous>, transform_indices = @transform_1, window_bounds = array<i64: 8, 128>}, {pipeline_mode = #tpu.pipeline_mode<synchronous>, transform_indices = @transform_2, window_bounds = array<i64: 1, 128>}, {transform_indices = @transform_3, window_bounds = array<i64: 16, 4>}]} {
    %c0 = arith.constant 0 : index
    %c0_0 = arith.constant 0 : index
    %0 = vector.load %arg1[%c0, %c0_0] : memref<16x8xbf16, #tpu.memory_space<vmem>>, vector<16x8xbf16>
    %c0_1 = arith.constant 0 : index
    %c0_2 = arith.constant 0 : index
    %1 = vector.load %arg2[%c0_1, %c0_2] : memref<8x128xbf16, #tpu.memory_space<vmem>>, vector<8x128xbf16>
    %cst = arith.constant dense<0.000000e+00> : vector<16x128xf32>
    %2 = tpu.matmul %0, %1, %cst {dimension_numbers = #tpu.dot_dimension_numbers<[1], [0], [0], [1], [0, 0, 1, 1], [], []>} : vector<16x8xbf16>, vector<8x128xbf16>, vector<16x128xf32> -> vector<16x128xf32>
    %c0_3 = arith.constant 0 : index
    %c0_4 = arith.constant 0 : index
    %3 = vector.load %arg3[%c0_3, %c0_4] : memref<1x128xf32, #tpu.memory_space<vmem>>, vector<1x128xf32>
    %4 = vector.broadcast %3 : vector<1x128xf32> to vector<16x128xf32>
    %5 = arith.addf %2, %4 : vector<16x128xf32>
    %cst_5 = arith.constant dense<0xFF800000> : vector<16xf32>
    %6 = vector.multi_reduction <maximumf>, %5, %cst_5 [1] : vector<16x128xf32> to vector<16xf32>
    %7 = vector.shape_cast %6 : vector<16xf32> to vector<16x1xf32>
    %8 = vector.broadcast %7 : vector<16x1xf32> to vector<16x128xf32>
    %9 = arith.subf %5, %8 : vector<16x128xf32>
    %10 = math.exp %9 : vector<16x128xf32>
    %cst_6 = arith.constant dense<0.000000e+00> : vector<16xf32>
    %11 = vector.multi_reduction <add>, %10, %cst_6 [1] : vector<16x128xf32> to vector<16xf32>
    %12 = vector.shape_cast %11 : vector<16xf32> to vector<16x1xf32>
    %13 = tpu.reciprocal %12 {approx = true} : vector<16x1xf32> -> vector<16x1xf32>
    %14 = vector.broadcast %13 : vector<16x1xf32> to vector<16x128xf32>
    %15 = arith.mulf %10, %14 : vector<16x128xf32>
    %16 = vector.extract_strided_slice %15 {offsets = [0, 0], sizes = [16, 4], strides = [1, 1]} : vector<16x128xf32> to vector<16x4xf32>
    %c0_7 = arith.constant 0 : index
    %c0_8 = arith.constant 0 : index
    %17 = vector.load %arg4[%c0_7, %c0_8] : memref<16x4xf32, #tpu.memory_space<vmem>>, vector<16x4xf32>
    tpu.vector_store %arg4[%c0_7, %c0_8], %16 {strides = array<i32>} : memref<16x4xf32, #tpu.memory_space<vmem>>, vector<16x4xf32>,
    return
  }
  func.func @transform_0(%arg0: i32) -> (i32, i32) {
    %c0_i32 = arith.constant 0 : i32
    %c0_i32_0 = arith.constant 0 : i32
    return %arg0, %c0_i32 : i32, i32
  }
  func.func @transform_1(%arg0: i32) -> (i32, i32) {
    %c0_i32 = arith.constant 0 : i32
    %c0_i32_0 = arith.constant 0 : i32
    %c0_i32_1 = arith.constant 0 : i32
    return %c0_i32, %c0_i32_0 : i32, i32
  }
  func.func @transform_2(%arg0: i32) -> (i32, i32) {
    %c0_i32 = arith.constant 0 : i32
    %c0_i32_0 = arith.constant 0 : i32
    %c0_i32_1 = arith.constant 0 : i32
    return %c0_i32, %c0_i32_0 : i32, i32
  }
  func.func @transform_3(%arg0: i32) -> (i32, i32) {
    %c0_i32 = arith.constant 0 : i32
    %c0_i32_0 = arith.constant 0 : i32
    return %arg0, %c0_i32 : i32, i32
  }
}

</mosaic_0001>

<llo_original>
// kernel: tpu_custom_call.1
$region0: #{tpu_custom_call.1}
  #allocation0 [shape = 'u32[]', space=smem, size = 0x4, offset = 0x4, fixed_abs, tag = 'smem constant byte address 0x4 - core index']
  #allocation1 [shape = 'u32[144,128]{1,0:T(1,128)}', space=vmem, size = 0x12000, scoped, tag = 'internal scratch']
  %s0 = inlined_call_operand.vmem [shape: bf16[16,8], index: 0, kind: input, shape index: {}]
  %s1 = inlined_call_operand.vmem [shape: bf16[8,128], index: 1, kind: input, shape index: {}]
  %s2 = inlined_call_operand.vmem [shape: f32[1,128], index: 2, kind: input, shape index: {}]
  %s3 = inlined_call_operand.vmem [shape: f32[16,4], index: 3, kind: output, shape index: {}]
  %s4 = sld [smem:[#allocation0]]
  $region22: #{tpu_custom_call.1} parent=0
    _
  %s6 = ssub.s32 1, %s4
  %s7 = scalar_select 0, %s6, %s4
  // Predicated region
  $region2: #{tpu_custom_call.1} parent=0 // pred_check
    _
  $region3: #{tpu_custom_call.1} parent=0 // pred_check_branch
    %9 = sbr.rel (0) target = $region5
  $region4: #{tpu_custom_call.1} parent=0 // pred_region
    _
  $region5: #{tpu_custom_call.1} parent=0 // pred_fallthru
    _
  // Predicated region
  $region6: #{tpu_custom_call.1} parent=0 // pred_check
    _
  $region7: #{tpu_custom_call.1} parent=0 // pred_check_branch
    %11 = sbr.rel (0) target = $region9
  $region8: #{tpu_custom_call.1} parent=0 // pred_region
    _
  $region9: #{tpu_custom_call.1} parent=0 // pred_fallthru
    _
  // Predicated region
  $region10: #{tpu_custom_call.1} parent=0 // pred_check
    _
  $region11: #{tpu_custom_call.1} parent=0 // pred_check_branch
    %13 = sbr.rel (0) target = $region13
  $region12: #{tpu_custom_call.1} parent=0 // pred_region
    _
  $region13: #{tpu_custom_call.1} parent=0 // pred_fallthru
    _
  %v15 = vld [vmem:[%s0] sm:$0xf]
  %v16 = vld [vmem:[%s0 + $0x4] sm:$0xf]
  %v17 = vld [vmem:[%s1] sm:$0xf]
  %v18 = vld [vmem:[%s2] sm:$0x1]
  %v20 = vlaneseq
  %v21 = vshrl.u32 %v20, 7
  %v22 = vsub.s32 0, %v21
  %v23 = vrot.slane %v18, %v22
  %v27 = vunpack.c.l.b16 %v15
  %v28 = vunpack.c.l.b16 %v16
  %v29 = vpack.c.b16 %v28, %v27
  %vm30 = vcmask 64512
  %v32 = vsel %vm30, %v29, 0
  %vm34 = vcmask 1043456
  %v36 = vsel %vm34, %v17, 0
  %38 = vmatprep.subr.bf16.mxu0 0
  %39 = vmatpush1.bf16.msra.mxu0 0
  %40 = vmatprep.subr.bf16.mxu0 0
  %41 = vmatpush1.bf16.msra.mxu0 0
  %42 = vmatprep.subr.bf16.mxu0 0
  %43 = vmatpush1.bf16.msra.mxu0 0
  %44 = vmatprep.subr.bf16.mxu0 0
  %45 = vmatpush1.bf16.msra.mxu0 0
  %46 = vmatprep.subr.bf16.mxu0 0
  %47 = vmatpush1.bf16.msra.mxu0 0
  %48 = vmatprep.subr.bf16.mxu0 0
  %49 = vmatpush1.bf16.msra.mxu0 0
  %50 = vmatprep.subr.bf16.mxu0 0
  %51 = vmatpush1.bf16.msra.mxu0 0
  %52 = vmatprep.subr.bf16.mxu0 0
  %53 = vmatpush1.bf16.msra.mxu0 %v36
  %54 = vmatprep.subr.bf16.mxu0 0
  %55 = vmatpush2.bf16.msra.mxu0 0
  %56 = vmatprep.subr.bf16.mxu0 0
  %57 = vmatpush2.bf16.msra.mxu0 0
  %58 = vmatprep.subr.bf16.mxu0 0
  %59 = vmatpush2.bf16.msra.mxu0 0
  %60 = vmatprep.subr.bf16.mxu0 0
  %61 = vmatpush2.bf16.msra.mxu0 0
  %62 = vmatprep.subr.bf16.mxu0 0
  %63 = vmatpush2.bf16.msra.mxu0 0
  %64 = vmatprep.subr.bf16.mxu0 0
  %65 = vmatpush2.bf16.msra.mxu0 0
  %66 = vmatprep.subr.bf16.mxu0 0
  %67 = vmatpush2.bf16.msra.mxu0 0
  %68 = vmatprep.subr.bf16.mxu0 0
  %69 = vmatpush2.bf16.msra.mxu0 0
  %70 = vmatprep.mubr.bf16.mxu0 0
  %71 = vmatmul.mubr.bf16.gmra.mxu0 %v32
  %v72 = vpop.f32.mrf.mxu0
  %v73 = vadd.f32 %v23, %v72
  %v74 = vpop.f32.mrf.mxu0
  %v75 = vpop.f32.mrf.mxu0
  %v76 = vadd.f32 %v23, %v75
  %v77 = vpop.f32.mrf.mxu0
  %78 = vdwg.mxu0
  %79 = vmax.xlane.f32.xlu0 %v73
  %v80 = vpop.xlane.xlu0 %79
  %81 = vmax.xlane.f32.xlu0 %v76
  %v82 = vpop.xlane.xlu0 %81
  %v83 = vsub.f32 %v73, %v80
  %v84 = vsub.f32 %v76, %v82
  %v85 = vmul.f32 %v83, 1.442695
  %v86 = vpow.pop %v85
  %v87 = vmul.f32 %v84, 1.442695
  %v88 = vpow.pop %v87
  %89 = vadd.xlane.f32.xlu0 %v86
  %v90 = vpop.xlane.xlu0 %89
  %91 = vadd.xlane.f32.xlu0 %v88
  %v92 = vpop.xlane.xlu0 %91
  %v93 = vrcp.pop %v90
  %v94 = vrcp.pop %v92
  %v95 = vmul.f32 %v86, %v93
  %v96 = vmul.f32 %v88, %v94
  %vm97 = vcmask 31744
  %98 = vst.msk [vmem:[%s3] sm:$0xff] %vm97, %v95
  %99 = vst.msk [vmem:[%s3 + $0x8] sm:$0xff] %vm97, %v96
  // Predicated region
  $region14: #{tpu_custom_call.1} parent=0 // pred_check
    _
  $region15: #{tpu_custom_call.1} parent=0 // pred_check_branch
    %101 = sbr.rel (0) target = $region17
  $region16: #{tpu_custom_call.1} parent=0 // pred_region
    _
  $region17: #{tpu_custom_call.1} parent=0 // pred_fallthru
    _
  // Predicated region
  $region18: #{tpu_custom_call.1} parent=0 // pred_check
    _
  $region19: #{tpu_custom_call.1} parent=0 // pred_check_branch
    %103 = sbr.rel (0) target = $region21
  $region20: #{tpu_custom_call.1} parent=0 // pred_region
    _
  $region21: #{tpu_custom_call.1} parent=0 // pred_fallthru
    _

</llo_original>
